<compile_context>
chip_gen: v6e
topology: v6e:2x2x1
jax: 0.10.0
libtpu: 0.0.40
codegen_flags: <defaults>
</compile_context>

<pallas_src>
import functools

import jax
import jax.numpy as jnp
from jax import lax
from jax.experimental import pallas as pl
from jax.experimental.pallas import tpu as pltpu


def _round_up(x, m):
    return (x + m - 1) // m * m


def _multiplet_loss_kernel(pred_ref, tgt_ref, samp_ref, ssq_ref, out_ref,
                           posm_ref, tsq_ref, neg2t_ref, acc_ref, *,
                           margin, b_actual, s_actual, block_b, block_s):
    b_idx = pl.program_id(0)
    k = pl.program_id(1)

    # ---- once per B-block: pos_dist+margin, ||t||^2, -2*t (MXU LHS), zero acc
    @pl.when(k == 0)
    def _init():
        tgt_nat = tgt_ref[...]                               # native dtype
        pred = pred_ref[...].astype(jnp.float32)
        tgt = tgt_nat.astype(jnp.float32)
        diff = pred - tgt
        posm_ref[...] = (jnp.sqrt(jnp.sum(diff * diff, axis=-1, keepdims=True))
                         + jnp.float32(margin))
        tsq_ref[...] = jnp.sum(tgt * tgt, axis=-1, keepdims=True)
        # -2 is a power of two: exact in bf16/f32, so the matmul operand stays
        # in native dtype (bf16 stays bf16 for the MXU on v5e/v6e).
        neg2t_ref[...] = tgt_nat * (-2)
        acc_ref[...] = jnp.zeros_like(acc_ref)

    # ---- per S-tile: ||t - s||^2 = ||t||^2 + ||s||^2 + (-2 t).s -------------
    ts = lax.dot_general(neg2t_ref[...], samp_ref[...],
                         dimension_numbers=(((1,), (1,)), ((), ())),
                         preferred_element_type=jnp.float32)   # (block_b, block_s)
    pw_sq = jnp.maximum(tsq_ref[...] + ssq_ref[...] + ts, 0.0)
    hinge = jnp.maximum(posm_ref[...] - jnp.sqrt(pw_sq), 0.0)

    # Lane-dense accumulation: collapse rows with a 1 x block_b MXU dot and
    # keep a (1, block_s) running row; lane reduce happens only in finalize.
    ones_bb = jnp.ones((1, block_b), jnp.float32)

    def _accumulate(h):
        acc_ref[...] += lax.dot_general(
            ones_bb, h,
            dimension_numbers=(((1,), (0,)), ((), ())),
            preferred_element_type=jnp.float32)                # (1, block_s)

    row_pad = (b_actual % block_b) != 0    # static
    col_pad = (s_actual % block_s) != 0    # static

    if not (row_pad or col_pad):
        _accumulate(hinge)
    else:
        conds = []
        if row_pad:
            conds.append(b_idx == pl.num_programs(0) - 1)
        if col_pad:
            conds.append(k == pl.num_programs(1) - 1)
        boundary = conds[0]
        for c in conds[1:]:
            boundary = jnp.logical_or(boundary, c)

        @pl.when(boundary)
        def _masked_tile():
            h = hinge
            if row_pad:
                row_ids = (b_idx * block_b
                           + lax.broadcasted_iota(jnp.int32, h.shape, 0))
                h = jnp.where(row_ids < b_actual, h, 0.0)
            if col_pad:
                col_ids = (k * block_s
                           + lax.broadcasted_iota(jnp.int32, h.shape, 1))
                h = jnp.where(col_ids < s_actual, h, 0.0)
            _accumulate(h)

        @pl.when(jnp.logical_not(boundary))
        def _interior_tile():
            _accumulate(hinge)

    # ---- finalize: one cross-lane reduce per B-block -------------------------
    @pl.when(k == pl.num_programs(1) - 1)
    def _finalize():
        out_ref[0, 0] = jnp.sum(acc_ref[...])


def _tpu_plan():
    """Returns (vmem_limit_bytes, tensorcores to shard the B axis over)."""
    try:
        kind = jax.devices()[0].device_kind.lower()
    except Exception:
        kind = ""
    if "v7" in kind:
        # v7x: 64 MiB VMEM per TensorCore -> keep the whole plan well under it,
        # and shard the "parallel" B axis across the 2 TensorCores.
        return 48 * 1024 * 1024, 2
    # v5e / v6e: 128 MiB physical VMEM, single TensorCore.
    return 96 * 1024 * 1024, 1


def _choose_tiles(B, S, D, in_itemsize, samp_itemsize, vmem_limit, num_cores):
    # Sub-32-bit dtypes pack along sublanes: bf16 wants multiples of 16, int8/fp8 32.
    sublane = {1: 32, 2: 16}.get(in_itemsize, 8)

    if num_cores >= 2 and B > sublane:
        # Guarantee grid_b >= num_cores so the parallel B axis shards across TCs.
        block_b = min(_round_up(-(-B // num_cores), sublane), 256)
    else:
        # Single TC: keep predicts/targets resident in one fat block so the
        # sampled matrix streams from HBM exactly once (when B fits).
        block_b = min(_round_up(B, sublane), 1024)

    usable = int(vmem_limit * 0.75)  # headroom for compiler scratch / spills
    fixed = (2 * 2 * block_b * D * in_itemsize     # pred + tgt, double buffered
             + block_b * D * in_itemsize           # -2*t scratch
             + 2 * block_b * 4)                    # pos+margin, ||t||^2
    per_s = (2 * D * samp_itemsize                 # sampled tile, double buffered
             + 2 * 4                               # ||s||^2 row, double buffered
             + 4                                   # accumulator row
             + 3 * block_b * 4)                    # f32 (block_b, block_s) temporaries
    budget_s = max(128, (usable - fixed) // max(per_s, 1))
    block_s = min(_round_up(S, 128), (budget_s // 128) * 128, 4096)
    block_s = max(block_s, 128)
    return block_b, block_s


def multiplet_loss(predicts, targets, sampled_word_vecs, margin=5.0):
    """predicts, targets: (B, D); sampled_word_vecs: (S, D). Returns scalar f32."""
    B, D = predicts.shape
    S, D2 = sampled_word_vecs.shape
    assert D2 == D and targets.shape == (B, D)

    vmem_limit, num_cores = _tpu_plan()
    block_b, block_s = _choose_tiles(
        B, S, D,
        jnp.dtype(targets.dtype).itemsize,
        jnp.dtype(sampled_word_vecs.dtype).itemsize,
        vmem_limit, num_cores)

    grid_b = pl.cdiv(B, block_b)
    grid_s = pl.cdiv(S, block_s)
    b_pad = grid_b * block_b
    s_pad = grid_s * block_s

    pred_p = predicts if b_pad == B else jnp.pad(predicts, ((0, b_pad - B), (0, 0)))
    tgt_p = targets if b_pad == B else jnp.pad(targets, ((0, b_pad - B), (0, 0)))
    samp_p = (sampled_word_vecs if s_pad == S
              else jnp.pad(sampled_word_vecs, ((0, s_pad - S), (0, 0))))

    # ||s||^2 computed once (tiny XLA op) and streamed lane-dense into the
    # kernel: removes a per-tile cast + square + M=1 matmul redone grid_b times.
    samp_f32 = samp_p.astype(jnp.float32)
    samp_sq = jnp.sum(samp_f32 * samp_f32, axis=-1)[None, :]   # (1, s_pad) f32

    kernel = functools.partial(
        _multiplet_loss_kernel, margin=float(margin),
        b_actual=B, s_actual=S, block_b=block_b, block_s=block_s)

    partial_sums = pl.pallas_call(
        kernel,
        out_shape=jax.ShapeDtypeStruct((grid_b, 1), jnp.float32),
        grid_spec=pltpu.PrefetchScalarGridSpec(
            num_scalar_prefetch=0,
            grid=(grid_b, grid_s),
            in_specs=[
                pl.BlockSpec((block_b, D), lambda b, k: (b, 0)),  # predicts (resident over k)
                pl.BlockSpec((block_b, D), lambda b, k: (b, 0)),  # targets  (resident over k)
                pl.BlockSpec((block_s, D), lambda b, k: (k, 0)),  # sampled  (streams over k)
                pl.BlockSpec((1, block_s), lambda b, k: (0, k)),  # ||s||^2  (streams over k)
            ],
            out_specs=pl.BlockSpec((1, 1), lambda b, k: (b, 0),
                                   memory_space=pltpu.MemorySpace.SMEM),
            scratch_shapes=[
                pltpu.VMEM((block_b, 1), jnp.float32),       # pos_dist + margin
                pltpu.VMEM((block_b, 1), jnp.float32),       # ||t||^2
                pltpu.VMEM((block_b, D), targets.dtype),     # -2 * targets (MXU LHS)
                pltpu.VMEM((1, block_s), jnp.float32),       # lane-dense hinge row sum
            ],
        ),
        compiler_params=pltpu.CompilerParams(
            dimension_semantics=("parallel", "arbitrary"),
            vmem_limit_bytes=vmem_limit,
        ),
    )(pred_p, tgt_p, samp_p, samp_sq)

    # Tiny wrapper-side reduce over B-blocks + mean normalization.
    return jnp.sum(partial_sums) * jnp.float32(1.0 / (B * S))


def _reference(predicts, targets, sampled, margin):
    pos = jnp.sqrt(jnp.sum((predicts - targets) ** 2, axis=-1))
    pw = jnp.sqrt(jnp.sum((targets[:, None, :] - sampled[None, :, :]) ** 2, axis=-1))
    trip = pos[:, None] - pw + margin
    return jnp.mean(jnp.maximum(trip, 0.0))


if __name__ == "__main__":
    # Small, deterministic setup consistent with the module's forward().
    B, D = 8, 32                 # batch, embedding dim
    vocab_size = 64
    sampling_word_size = 10
    margin = 5.0

    key = jax.random.PRNGKey(0)
    k_emb, k_idx, k_pred, k_tgt = jax.random.split(key, 4)

    # Deterministic "model.predictor.all_word_embeddings()" parameter.
    word_embeddings = jax.random.normal(k_emb, (vocab_size, D), dtype=jnp.float32)

    # Deterministic replacement for np.random.choice(vocab_size, size=S).
    sample_idx = jax.random.choice(k_idx, vocab_size, shape=(sampling_word_size,))
    sampled_word_vecs = word_embeddings[sample_idx]  # (S, D)

    predicts = jax.random.normal(k_pred, (B, D), dtype=jnp.float32)
    targets = jax.random.normal(k_tgt, (B, D), dtype=jnp.float32)

    loss = multiplet_loss(predicts, targets, sampled_word_vecs, margin=margin)
    loss = jax.block_until_ready(loss)

    ref = _reference(predicts, targets, sampled_word_vecs, margin)
    assert jnp.allclose(loss, ref, rtol=1e-5, atol=1e-5), (loss, ref)

    print("KERNEL_OK")
</pallas_src>

<mosaic_0001>
module attributes {stable_mosaic.version = 11 : i64} {
  func.func @_multiplet_loss_kernel(%arg0: i32, %arg1: i32, %arg2: memref<8x32xf32, #tpu.memory_space<vmem>>, %arg3: memref<8x32xf32, #tpu.memory_space<vmem>>, %arg4: memref<128x32xf32, #tpu.memory_space<vmem>>, %arg5: memref<1x128xf32, #tpu.memory_space<vmem>>, %arg6: memref<1x1xf32, #tpu.memory_space<smem>>, %arg7: memref<8x1xf32, #tpu.memory_space<vmem>>, %arg8: memref<8x1xf32, #tpu.memory_space<vmem>>, %arg9: memref<8x32xf32, #tpu.memory_space<vmem>>, %arg10: memref<1x128xf32, #tpu.memory_space<vmem>>) attributes {dimension_semantics = [#tpu.dimension_semantics<parallel>, #tpu.dimension_semantics<arbitrary>], iteration_bounds = array<i64: 1, 1>, scalar_prefetch = 0 : i64, scratch_operands = 4 : i64, tpu.core_type = #tpu.core_type<tc>, window_params = [{transform_indices = @transform_0, window_bounds = array<i64: 8, 32>}, {transform_indices = @transform_1, window_bounds = array<i64: 8, 32>}, {transform_indices = @transform_2, window_bounds = array<i64: 128, 32>}, {transform_indices = @transform_3, window_bounds = array<i64: 1, 128>}, {transform_indices = @transform_4, window_bounds = array<i64: 1, 1>}]} {
    %c0_i32 = arith.constant 0 : i32
    %0 = arith.cmpi eq, %arg1, %c0_i32 : i32
    %1 = arith.extui %0 : i1 to i32
    %c0_i32_0 = arith.constant 0 : i32
    %2 = arith.cmpi ne, %1, %c0_i32_0 : i32
    scf.if %2 {
      %c0_18 = arith.constant 0 : index
      %c0_19 = arith.constant 0 : index
      %30 = vector.load %arg3[%c0_18, %c0_19] : memref<8x32xf32, #tpu.memory_space<vmem>>, vector<8x32xf32>
      %c0_20 = arith.constant 0 : index
      %c0_21 = arith.constant 0 : index
      %31 = vector.load %arg2[%c0_20, %c0_21] : memref<8x32xf32, #tpu.memory_space<vmem>>, vector<8x32xf32>
      %32 = arith.subf %31, %30 : vector<8x32xf32>
      %33 = arith.mulf %32, %32 : vector<8x32xf32>
      %cst_22 = arith.constant dense<0.000000e+00> : vector<8xf32>
      %34 = vector.multi_reduction <add>, %33, %cst_22 [1] : vector<8x32xf32> to vector<8xf32>
      %35 = vector.shape_cast %34 : vector<8xf32> to vector<8x1xf32>
      %36 = math.sqrt %35 : vector<8x1xf32>
      %cst_23 = arith.constant 5.000000e+00 : f32
      %37 = vector.broadcast %cst_23 : f32 to vector<8x1xf32>
      %38 = arith.addf %36, %37 : vector<8x1xf32>
      %c0_24 = arith.constant 0 : index
      %c0_25 = arith.constant 0 : index
      %39 = vector.load %arg7[%c0_24, %c0_25] : memref<8x1xf32, #tpu.memory_space<vmem>>, vector<8x1xf32>
      tpu.vector_store %arg7[%c0_24, %c0_25], %38 {strides = array<i32>} : memref<8x1xf32, #tpu.memory_space<vmem>>, vector<8x1xf32>,
      %40 = arith.mulf %30, %30 : vector<8x32xf32>
      %cst_26 = arith.constant dense<0.000000e+00> : vector<8xf32>
      %41 = vector.multi_reduction <add>, %40, %cst_26 [1] : vector<8x32xf32> to vector<8xf32>
      %42 = vector.shape_cast %41 : vector<8xf32> to vector<8x1xf32>
      %c0_27 = arith.constant 0 : index
      %c0_28 = arith.constant 0 : index
      %43 = vector.load %arg8[%c0_27, %c0_28] : memref<8x1xf32, #tpu.memory_space<vmem>>, vector<8x1xf32>
      tpu.vector_store %arg8[%c0_27, %c0_28], %42 {strides = array<i32>} : memref<8x1xf32, #tpu.memory_space<vmem>>, vector<8x1xf32>,
      %cst_29 = arith.constant -2.000000e+00 : f32
      %44 = vector.broadcast %cst_29 : f32 to vector<8x32xf32>
      %45 = arith.mulf %30, %44 : vector<8x32xf32>
      %c0_30 = arith.constant 0 : index
      %c0_31 = arith.constant 0 : index
      %46 = vector.load %arg9[%c0_30, %c0_31] : memref<8x32xf32, #tpu.memory_space<vmem>>, vector<8x32xf32>
      tpu.vector_store %arg9[%c0_30, %c0_31], %45 {strides = array<i32>} : memref<8x32xf32, #tpu.memory_space<vmem>>, vector<8x32xf32>,
      %cst_32 = arith.constant 0.000000e+00 : f32
      %47 = vector.broadcast %cst_32 : f32 to vector<1x128xf32>
      %c0_33 = arith.constant 0 : index
      %c0_34 = arith.constant 0 : index
      %48 = vector.load %arg10[%c0_33, %c0_34] : memref<1x128xf32, #tpu.memory_space<vmem>>, vector<1x128xf32>
      tpu.vector_store %arg10[%c0_33, %c0_34], %47 {strides = array<i32>} : memref<1x128xf32, #tpu.memory_space<vmem>>, vector<1x128xf32>,
    } else {
    }
    %c0 = arith.constant 0 : index
    %c0_1 = arith.constant 0 : index
    %3 = vector.load %arg9[%c0, %c0_1] : memref<8x32xf32, #tpu.memory_space<vmem>>, vector<8x32xf32>
    %c0_2 = arith.constant 0 : index
    %c0_3 = arith.constant 0 : index
    %4 = vector.load %arg4[%c0_2, %c0_3] : memref<128x32xf32, #tpu.memory_space<vmem>>, vector<128x32xf32>
    %cst = arith.constant dense<0.000000e+00> : vector<8x128xf32>
    %5 = tpu.matmul %3, %4, %cst {dimension_numbers = #tpu.dot_dimension_numbers<[1], [1], [0], [0], [0, 0, 1, 0], [], []>} : vector<8x32xf32>, vector<128x32xf32>, vector<8x128xf32> -> vector<8x128xf32>
    %c0_4 = arith.constant 0 : index
    %c0_5 = arith.constant 0 : index
    %6 = vector.load %arg8[%c0_4, %c0_5] : memref<8x1xf32, #tpu.memory_space<vmem>>, vector<8x1xf32>
    %c0_6 = arith.constant 0 : index
    %c0_7 = arith.constant 0 : index
    %7 = vector.load %arg5[%c0_6, %c0_7] : memref<1x128xf32, #tpu.memory_space<vmem>>, vector<1x128xf32>
    %8 = vector.broadcast %6 : vector<8x1xf32> to vector<8x128xf32>
    %9 = vector.broadcast %7 : vector<1x128xf32> to vector<8x128xf32>
    %10 = arith.addf %8, %9 : vector<8x128xf32>
    %11 = arith.addf %10, %5 : vector<8x128xf32>
    %cst_8 = arith.constant 0.000000e+00 : f32
    %12 = vector.broadcast %cst_8 : f32 to vector<8x128xf32>
    %13 = arith.maximumf %11, %12 : vector<8x128xf32>
    %c0_9 = arith.constant 0 : index
    %c0_10 = arith.constant 0 : index
    %14 = vector.load %arg7[%c0_9, %c0_10] : memref<8x1xf32, #tpu.memory_space<vmem>>, vector<8x1xf32>
    %15 = math.sqrt %13 : vector<8x128xf32>
    %16 = vector.broadcast %14 : vector<8x1xf32> to vector<8x128xf32>
    %17 = arith.subf %16, %15 : vector<8x128xf32>
    %cst_11 = arith.constant 0.000000e+00 : f32
    %18 = vector.broadcast %cst_11 : f32 to vector<8x128xf32>
    %19 = arith.maximumf %17, %18 : vector<8x128xf32>
    %cst_12 = arith.constant 1.000000e+00 : f32
    %20 = vector.broadcast %cst_12 : f32 to vector<1x8xf32>
    %c0_i32_13 = arith.constant 0 : i32
    %21 = arith.cmpi eq, %arg1, %c0_i32_13 : i32
    %22 = arith.extui %21 : i1 to i32
    %c0_i32_14 = arith.constant 0 : i32
    %23 = arith.cmpi ne, %22, %c0_i32_14 : i32
    scf.if %23 {
      %c128_i32 = arith.constant 128 : i32
      %30 = arith.muli %arg1, %c128_i32 : i32
      %31 = tpu.iota {dimensions = array<i32: 1>} : vector<8x128xi32>
      %32 = vector.broadcast %30 : i32 to vector<8x128xi32>
      %33 = arith.addi %32, %31 : vector<8x128xi32>
      %c10_i32 = arith.constant 10 : i32
      %34 = vector.broadcast %c10_i32 : i32 to vector<8x128xi32>
      %35 = arith.cmpi slt, %33, %34 : vector<8x128xi32>
      %cst_18 = arith.constant 0.000000e+00 : f32
      %36 = vector.broadcast %cst_18 : f32 to vector<8x128xf32>
      %37 = arith.select %35, %19, %36 : vector<8x128xi1>, vector<8x128xf32>
      %c0_19 = arith.constant 0 : index
      %c0_20 = arith.constant 0 : index
      %38 = vector.load %arg10[%c0_19, %c0_20] : memref<1x128xf32, #tpu.memory_space<vmem>>, vector<1x128xf32>
      %cst_21 = arith.constant dense<0.000000e+00> : vector<1x128xf32>
      %39 = tpu.matmul %20, %37, %cst_21 {dimension_numbers = #tpu.dot_dimension_numbers<[1], [0], [0], [1], [0, 0, 1, 1], [], []>} : vector<1x8xf32>, vector<8x128xf32>, vector<1x128xf32> -> vector<1x128xf32>
      %40 = arith.addf %38, %39 : vector<1x128xf32>
      %c0_22 = arith.constant 0 : index
      %c0_23 = arith.constant 0 : index
      %41 = vector.load %arg10[%c0_22, %c0_23] : memref<1x128xf32, #tpu.memory_space<vmem>>, vector<1x128xf32>
      tpu.vector_store %arg10[%c0_22, %c0_23], %40 {strides = array<i32>} : memref<1x128xf32, #tpu.memory_space<vmem>>, vector<1x128xf32>,
    } else {
    }
    %true = arith.constant true
    %24 = arith.xori %21, %true : i1
    %25 = arith.extui %24 : i1 to i32
    %c0_i32_15 = arith.constant 0 : i32
    %26 = arith.cmpi ne, %25, %c0_i32_15 : i32
    scf.if %26 {
      %c0_18 = arith.constant 0 : index
      %c0_19 = arith.constant 0 : index
      %30 = vector.load %arg10[%c0_18, %c0_19] : memref<1x128xf32, #tpu.memory_space<vmem>>, vector<1x128xf32>
      %cst_20 = arith.constant dense<0.000000e+00> : vector<1x128xf32>
      %31 = tpu.matmul %20, %19, %cst_20 {dimension_numbers = #tpu.dot_dimension_numbers<[1], [0], [0], [1], [0, 0, 1, 1], [], []>} : vector<1x8xf32>, vector<8x128xf32>, vector<1x128xf32> -> vector<1x128xf32>
      %32 = arith.addf %30, %31 : vector<1x128xf32>
      %c0_21 = arith.constant 0 : index
      %c0_22 = arith.constant 0 : index
      %33 = vector.load %arg10[%c0_21, %c0_22] : memref<1x128xf32, #tpu.memory_space<vmem>>, vector<1x128xf32>
      tpu.vector_store %arg10[%c0_21, %c0_22], %32 {strides = array<i32>} : memref<1x128xf32, #tpu.memory_space<vmem>>, vector<1x128xf32>,
    } else {
    }
    %c0_i32_16 = arith.constant 0 : i32
    %27 = arith.cmpi eq, %arg1, %c0_i32_16 : i32
    %28 = arith.extui %27 : i1 to i32
    %c0_i32_17 = arith.constant 0 : i32
    %29 = arith.cmpi ne, %28, %c0_i32_17 : i32
    scf.if %29 {
      %c0_18 = arith.constant 0 : index
      %c0_19 = arith.constant 0 : index
      %30 = vector.load %arg10[%c0_18, %c0_19] : memref<1x128xf32, #tpu.memory_space<vmem>>, vector<1x128xf32>
      %31 = vector.shape_cast %30 : vector<1x128xf32> to vector<1x1x128xf32>
      %cst_20 = arith.constant dense<0.000000e+00> : vector<1xf32>
      %32 = vector.multi_reduction <add>, %31, %cst_20 [1, 2] : vector<1x1x128xf32> to vector<1xf32>
      %33 = vector.shape_cast %32 : vector<1xf32> to vector<1x1x1xf32>
      %34 = vector.extract %33[0, 0, 0] : f32 from vector<1x1x1xf32>
      %c0_21 = arith.constant 0 : index
      %c0_22 = arith.constant 0 : index
      %35 = memref.load %arg6[%c0_21, %c0_22] : memref<1x1xf32, #tpu.memory_space<smem>>
      memref.store %34, %arg6[%c0_21, %c0_22] : memref<1x1xf32, #tpu.memory_space<smem>>
    } else {
    }
    return
  }
  func.func @transform_0(%arg0: i32, %arg1: i32) -> (i32, i32) {
    %c0_i32 = arith.constant 0 : i32
    %c0_i32_0 = arith.constant 0 : i32
    return %arg0, %c0_i32 : i32, i32
  }
  func.func @transform_1(%arg0: i32, %arg1: i32) -> (i32, i32) {
    %c0_i32 = arith.constant 0 : i32
    %c0_i32_0 = arith.constant 0 : i32
    return %arg0, %c0_i32 : i32, i32
  }
  func.func @transform_2(%arg0: i32, %arg1: i32) -> (i32, i32) {
    %c0_i32 = arith.constant 0 : i32
    %c0_i32_0 = arith.constant 0 : i32
    return %arg1, %c0_i32 : i32, i32
  }
  func.func @transform_3(%arg0: i32, %arg1: i32) -> (i32, i32) {
    %c0_i32 = arith.constant 0 : i32
    %c0_i32_0 = arith.constant 0 : i32
    return %c0_i32, %arg1 : i32, i32
  }
  func.func @transform_4(%arg0: i32, %arg1: i32) -> (i32, i32) {
    %c0_i32 = arith.constant 0 : i32
    %c0_i32_0 = arith.constant 0 : i32
    return %arg0, %c0_i32 : i32, i32
  }
}

</mosaic_0001>

<llo_original>
// kernel: tpu_custom_call.1
$region0: #{tpu_custom_call.1}
  #allocation0 [shape = 'u32[]', space=smem, size = 0x4, offset = 0x4, fixed_abs, tag = 'smem constant byte address 0x4 - core index']
  #allocation1 [shape = 'u32[144,128]{1,0:T(1,128)}', space=vmem, size = 0x12000, scoped, tag = 'internal scratch']
  #allocation2 [shape = 'f32[8,1]{1,0:T(8,128)}', space=vmem, size = 0x1000, scoped, tag = 'scratch operand']
  #allocation3 [shape = 'f32[8,1]{1,0:T(8,128)}', space=vmem, size = 0x1000, scoped, tag = 'scratch operand']
  #allocation4 [shape = 'f32[8,32]{1,0:T(8,128)}', space=vmem, size = 0x1000, scoped, tag = 'scratch operand']
  #allocation5 [shape = 'f32[1,128]{1,0:T(1,128)}', space=vmem, size = 0x200, scoped, tag = 'scratch operand']
  %s0 = inlined_call_operand.vmem [shape: f32[8,32], index: 0, kind: input, shape index: {}]
  %s1 = inlined_call_operand.vmem [shape: f32[8,32], index: 1, kind: input, shape index: {}]
  %s2 = inlined_call_operand.vmem [shape: f32[128,32], index: 2, kind: input, shape index: {}]
  %s3 = inlined_call_operand.vmem [shape: f32[1,128], index: 3, kind: input, shape index: {}]
  %s4 = inlined_call_operand.hbm [shape: f32[1,1], index: 4, kind: output, shape index: {}]
  %s5 = sld [smem:[#allocation0]]
  $region42: #{tpu_custom_call.1} parent=0
    _
  %s7 = ssub.s32 1, %s5
  %s8 = scalar_select 0, %s7, %s5
  $region1: #{tpu_custom_call.1} parent=0
    #allocation6 [shape = 'u8[512]{0}', space=smem, size = 0x200, scoped, tag = 'output window, operand 0, single buffered']
    #allocation7 [shape = 's32[1]{0}', space=sflag, size = 0x4, scoped, tag = 'scoped memory for tpu_custom_call.1']
    %9 = vsyncpa [#allocation7], 0
    // Predicated region
    $region2: #{tpu_custom_call.1} parent=1 // pred_check
      _
    $region3: #{tpu_custom_call.1} parent=1 // pred_check_branch
      %11 = sbr.rel (0) target = $region5
    $region4: #{tpu_custom_call.1} parent=1 // pred_region
      _
    $region5: #{tpu_custom_call.1} parent=1 // pred_fallthru
      _
    // Predicated region
    $region6: #{tpu_custom_call.1} parent=1 // pred_check
      _
    $region7: #{tpu_custom_call.1} parent=1 // pred_check_branch
      %13 = sbr.rel (0) target = $region9
    $region8: #{tpu_custom_call.1} parent=1 // pred_region
      _
    $region9: #{tpu_custom_call.1} parent=1 // pred_fallthru
      _
    // Predicated region
    $region10: #{tpu_custom_call.1} parent=1 // pred_check
      _
    $region11: #{tpu_custom_call.1} parent=1 // pred_check_branch
      %15 = sbr.rel (0) target = $region13
    $region12: #{tpu_custom_call.1} parent=1 // pred_region
      _
    $region13: #{tpu_custom_call.1} parent=1 // pred_fallthru
      _
    // Predicated region
    $region14: #{tpu_custom_call.1} parent=1 // pred_check
      _
    $region15: #{tpu_custom_call.1} parent=1 // pred_check_branch
      %17 = sbr.rel (0) target = $region17
    $region16: #{tpu_custom_call.1} parent=1 // pred_region
      _
    $region17: #{tpu_custom_call.1} parent=1 // pred_fallthru
      _
    %p18 = scmp.eq.s32.totalorder 0, 0
    // Predicated region
    $region18: #{tpu_custom_call.1} parent=1 // pred_check
      %p19 = pneg %p18
    $region19: #{tpu_custom_call.1} parent=1 // pred_check_branch
      %21 = sbr.rel (%p19) target = $region21
    $region20: #{tpu_custom_call.1} parent=1 // pred_region
      %v22 = vld [vmem:[%s1] sm:$0xff]
      %v23 = vld [vmem:[%s0] sm:$0xff]
      %v24 = vsub.f32 %v23, %v22
      %v25 = vmul.f32 %v24, %v24
      %vm26 = vcmask 261120
      %v27 = vsel %vm26, %v25, 0.0
      %28 = vadd.xlane.f32.xlu0 %v27
      %v29 = vpop.xlane.xlu0 %28
      %v30 = vrsqrt.pop %v29
      %v31 = vmul.f32 %v29, %v30
      %vm32 = vcmp.eq.f32.partialorder %v29, inf
      %v33 = vsel %vm32, %v29, %v31
      %vm34 = vcmp.eq.f32.partialorder %v29, 0.0
      %v35 = vand.u32 %v29, 2147483648
      %v36 = vsel %vm34, %v35, %v33
      %v37 = vadd.f32 %v36, 5.0
      %vm38 = vcmask 7168
      %39 = vst.msk [vmem:[#allocation2] sm:$0xff] %vm38, %v37
      %v40 = vmul.f32 %v22, %v22
      %v41 = vsel %vm26, %v40, 0.0
      %42 = vadd.xlane.f32.xlu0 %v41
      %v43 = vpop.xlane.xlu0 %42
      %44 = vst.msk [vmem:[#allocation3] sm:$0xff] %vm38, %v43
      %v45 = vmul.f32 %v22, -2.0
      %46 = vst.msk [vmem:[#allocation4] sm:$0xff] %vm26, %v45
      %47 = vst [vmem:[#allocation5] sm:$0x1] 0.0
    $region21: #{tpu_custom_call.1} parent=1 // pred_fallthru
      _
    %v48 = vld [vmem:[#allocation4] sm:$0xff]
    %v49 = vld [vmem:[%s2] sm:$0xff]
    %v50 = vld [vmem:[%s2 + $0x8] sm:$0xff]
    %v51 = vld [vmem:[%s2 + $0x10] sm:$0xff]
    %v52 = vld [vmem:[%s2 + $0x18] sm:$0xff]
    %v53 = vld [vmem:[%s2 + $0x20] sm:$0xff]
    %v54 = vld [vmem:[%s2 + $0x28] sm:$0xff]
    %v55 = vld [vmem:[%s2 + $0x30] sm:$0xff]
    %v56 = vld [vmem:[%s2 + $0x38] sm:$0xff]
    %v57 = vld [vmem:[%s2 + $0x40] sm:$0xff]
    %v58 = vld [vmem:[%s2 + $0x48] sm:$0xff]
    %v59 = vld [vmem:[%s2 + $0x50] sm:$0xff]
    %v60 = vld [vmem:[%s2 + $0x58] sm:$0xff]
    %v61 = vld [vmem:[%s2 + $0x60] sm:$0xff]
    %v62 = vld [vmem:[%s2 + $0x68] sm:$0xff]
    %v63 = vld [vmem:[%s2 + $0x70] sm:$0xff]
    %v64 = vld [vmem:[%s2 + $0x78] sm:$0xff]
    %vm65 = vcmask 261120
    %v67 = vsel %vm65, %v48, 0
    %v70 = vsel %vm65, %v49, 0
    %v73 = vsel %vm65, %v50, 0
    %v76 = vsel %vm65, %v51, 0
    %v79 = vsel %vm65, %v52, 0
    %v82 = vsel %vm65, %v53, 0
    %v85 = vsel %vm65, %v54, 0
    %v88 = vsel %vm65, %v55, 0
    %v91 = vsel %vm65, %v56, 0
    %v94 = vsel %vm65, %v57, 0
    %v97 = vsel %vm65, %v58, 0
    %v100 = vsel %vm65, %v59, 0
    %v103 = vsel %vm65, %v60, 0
    %v106 = vsel %vm65, %v61, 0
    %v109 = vsel %vm65, %v62, 0
    %v112 = vsel %vm65, %v63, 0
    %v115 = vsel %vm65, %v64, 0
    %117 = vmatprep.subr.mxu0 0.0
    %118 = vmatpush1.xpose.msra.mxu0 %v115
    %119 = vmatprep.subr.mxu0 0.0
    %120 = vmatpush1.xpose.msra.mxu0 %v112
    %121 = vmatprep.subr.mxu0 0.0
    %122 = vmatpush1.xpose.msra.mxu0 %v109
    %123 = vmatprep.subr.mxu0 0.0
    %124 = vmatpush1.xpose.msra.mxu0 %v106
    %125 = vmatprep.subr.mxu0 0.0
    %126 = vmatpush1.xpose.msra.mxu0 %v103
    %127 = vmatprep.subr.mxu0 0.0
    %128 = vmatpush1.xpose.msra.mxu0 %v100
    %129 = vmatprep.subr.mxu0 0.0
    %130 = vmatpush1.xpose.msra.mxu0 %v97
    %131 = vmatprep.subr.mxu0 0.0
    %132 = vmatpush1.xpose.msra.mxu0 %v94
    %133 = vmatprep.subr.mxu0 0.0
    %134 = vmatpush1.xpose.msra.mxu0 %v91
    %135 = vmatprep.subr.mxu0 0.0
    %136 = vmatpush1.xpose.msra.mxu0 %v88
    %137 = vmatprep.subr.mxu0 0.0
    %138 = vmatpush1.xpose.msra.mxu0 %v85
    %139 = vmatprep.subr.mxu0 0.0
    %140 = vmatpush1.xpose.msra.mxu0 %v82
    %141 = vmatprep.subr.mxu0 0.0
    %142 = vmatpush1.xpose.msra.mxu0 %v79
    %143 = vmatprep.subr.mxu0 0.0
    %144 = vmatpush1.xpose.msra.mxu0 %v76
    %145 = vmatprep.subr.mxu0 0.0
    %146 = vmatpush1.xpose.msra.mxu0 %v73
    %147 = vmatprep.subr.mxu0 0.0
    %148 = vmatpush1.xpose.msra.mxu0 %v70
    %149 = vmatprep.subr.mxu0 0.0
    %150 = vmatpush2.xpose.msra.mxu0 0.0
    %151 = vmatprep.subr.mxu0 0.0
    %152 = vmatpush2.xpose.msra.mxu0 0.0
    %153 = vmatprep.subr.mxu0 0.0
    %154 = vmatpush2.xpose.msra.mxu0 0.0
    %155 = vmatprep.subr.mxu0 0.0
    %156 = vmatpush2.xpose.msra.mxu0 0.0
    %157 = vmatprep.subr.mxu0 0.0
    %158 = vmatpush2.xpose.msra.mxu0 0.0
    %159 = vmatprep.subr.mxu0 0.0
    %160 = vmatpush2.xpose.msra.mxu0 0.0
    %161 = vmatprep.subr.mxu0 0.0
    %162 = vmatpush2.xpose.msra.mxu0 0.0
    %163 = vmatprep.subr.mxu0 0.0
    %164 = vmatpush2.xpose.msra.mxu0 0.0
    %165 = vmatprep.subr.mxu0 0.0
    %166 = vmatpush2.xpose.msra.mxu0 0.0
    %167 = vmatprep.subr.mxu0 0.0
    %168 = vmatpush2.xpose.msra.mxu0 0.0
    %169 = vmatprep.subr.mxu0 0.0
    %170 = vmatpush2.xpose.msra.mxu0 0.0
    %171 = vmatprep.subr.mxu0 0.0
    %172 = vmatpush2.xpose.msra.mxu0 0.0
    %173 = vmatprep.subr.mxu0 0.0
    %174 = vmatpush2.xpose.msra.mxu0 0.0
    %175 = vmatprep.subr.mxu0 0.0
    %176 = vmatpush2.xpose.msra.mxu0 0.0
    %177 = vmatprep.subr.mxu0 0.0
    %178 = vmatpush2.xpose.msra.mxu0 0.0
    %179 = vmatprep.subr.mxu0 0.0
    %180 = vmatpush2.xpose.msra.mxu0 0.0
    %181 = vmatprep.mubr.f32.mxu0 0.0
    %182 = vmatmul.mubr.f32.gmra.mxu0 %v67
    %v183 = vpop.f32.mrf.mxu0
    %v184 = vadd.f32 0.0, %v183
    %v185 = vpop.f32.mrf.mxu0
    %186 = vdwg.mxu0
    %v187 = vld [vmem:[#allocation3] sm:$0xff]
    %v188 = vld [vmem:[%s3] sm:$0x1]
    %190 = vset.pattern.permute.xlu0 0
    %191 = vperm.xlu0 %190, %v187
    %v192 = vpop.permute.xlu0 %191
    %v195 = vlaneseq
    %v196 = vshrl.u32 %v195, 7
    %v197 = vsub.s32 0, %v196
    %v198 = vrot.slane %v188, %v197
    %v200 = vadd.f32 %v192, %v198
    %v201 = vadd.f32 %v200, %v184
    %v202 = vmax.f32 %v201, 0.0
    %v203 = vld [vmem:[#allocation2] sm:$0xff]
    %v204 = vrsqrt.pop %v202
    %v205 = vmul.f32 %v202, %v204
    %vm206 = vcmp.eq.f32.partialorder %v202, inf
    %v207 = vsel %vm206, %v202, %v205
    %vm208 = vcmp.eq.f32.partialorder %v202, 0.0
    %v209 = vand.u32 %v202, 2147483648
    %v210 = vsel %vm208, %v209, %v207
    %212 = vset.pattern.permute.xlu0 0
    %213 = vperm.xlu0 %212, %v203
    %v214 = vpop.permute.xlu0 %213
    %v216 = vsub.f32 %v214, %v210
    %v217 = vmax.f32 %v216, 0.0
    // Predicated region
    $region22: #{tpu_custom_call.1} parent=1 // pred_check
      %p218 = pneg %p18
    $region23: #{tpu_custom_call.1} parent=1 // pred_check_branch
      %220 = sbr.rel (%p218) target = $region25
    $region24: #{tpu_custom_call.1} parent=1 // pred_region
      %s221 = smul.u32 0, 128
      %v222 = vlaneseq
      %v223 = vand.u32 %v222, 127
      %v224 = vstv %s221
      %v225 = vadd.s32 %v224, %v223
      %vm226 = vcmp.lt.s32.totalorder %v225, 10
      %v227 = vsel %vm226, %v217, 0.0
      %v228 = vld [vmem:[#allocation5] sm:$0x1]
      %vm229 = vcmask 64512
      %v231 = vsel %vm229, 1.0, 0
      %233 = vmatprep.subr.mxu0 0.0
      %234 = vmatpush1.msra.mxu0 0.0
      %235 = vmatprep.subr.mxu0 0.0
      %236 = vmatpush1.msra.mxu0 0.0
      %237 = vmatprep.subr.mxu0 0.0
      %238 = vmatpush1.msra.mxu0 0.0
      %239 = vmatprep.subr.mxu0 0.0
      %240 = vmatpush1.msra.mxu0 0.0
      %241 = vmatprep.subr.mxu0 0.0
      %242 = vmatpush1.msra.mxu0 0.0
      %243 = vmatprep.subr.mxu0 0.0
      %244 = vmatpush1.msra.mxu0 0.0
      %245 = vmatprep.subr.mxu0 0.0
      %246 = vmatpush1.msra.mxu0 0.0
      %247 = vmatprep.subr.mxu0 0.0
      %248 = vmatpush1.msra.mxu0 0.0
      %249 = vmatprep.subr.mxu0 0.0
      %250 = vmatpush1.msra.mxu0 0.0
      %251 = vmatprep.subr.mxu0 0.0
      %252 = vmatpush1.msra.mxu0 0.0
      %253 = vmatprep.subr.mxu0 0.0
      %254 = vmatpush1.msra.mxu0 0.0
      %255 = vmatprep.subr.mxu0 0.0
      %256 = vmatpush1.msra.mxu0 0.0
      %257 = vmatprep.subr.mxu0 0.0
      %258 = vmatpush1.msra.mxu0 0.0
      %259 = vmatprep.subr.mxu0 0.0
      %260 = vmatpush1.msra.mxu0 0.0
      %261 = vmatprep.subr.mxu0 0.0
      %262 = vmatpush1.msra.mxu0 0.0
      %263 = vmatprep.subr.mxu0 0.0
      %264 = vmatpush1.msra.mxu0 %v227
      %265 = vmatprep.subr.mxu0 0.0
      %266 = vmatpush2.msra.mxu0 0.0
      %267 = vmatprep.subr.mxu0 0.0
      %268 = vmatpush2.msra.mxu0 0.0
      %269 = vmatprep.subr.mxu0 0.0
      %270 = vmatpush2.msra.mxu0 0.0
      %271 = vmatprep.subr.mxu0 0.0
      %272 = vmatpush2.msra.mxu0 0.0
      %273 = vmatprep.subr.mxu0 0.0
      %274 = vmatpush2.msra.mxu0 0.0
      %275 = vmatprep.subr.mxu0 0.0
      %276 = vmatpush2.msra.mxu0 0.0
      %277 = vmatprep.subr.mxu0 0.0
      %278 = vmatpush2.msra.mxu0 0.0
      %279 = vmatprep.subr.mxu0 0.0
      %280 = vmatpush2.msra.mxu0 0.0
      %281 = vmatprep.subr.mxu0 0.0
      %282 = vmatpush2.msra.mxu0 0.0
      %283 = vmatprep.subr.mxu0 0.0
      %284 = vmatpush2.msra.mxu0 0.0
      %285 = vmatprep.subr.mxu0 0.0
      %286 = vmatpush2.msra.mxu0 0.0
      %287 = vmatprep.subr.mxu0 0.0
      %288 = vmatpush2.msra.mxu0 0.0
      %289 = vmatprep.subr.mxu0 0.0
      %290 = vmatpush2.msra.mxu0 0.0
      %291 = vmatprep.subr.mxu0 0.0
      %292 = vmatpush2.msra.mxu0 0.0
      %293 = vmatprep.subr.mxu0 0.0
      %294 = vmatpush2.msra.mxu0 0.0
      %295 = vmatprep.subr.mxu0 0.0
      %296 = vmatpush2.msra.mxu0 0.0
      %297 = vmatprep.mubr.f32.mxu0 0.0
      %298 = vmatmul.mubr.f32.gmra.mxu0 %v231
      %v299 = vpop.f32.mrf.mxu0
      %v300 = vadd.f32 0.0, %v299
      %v301 = vpop.f32.mrf.mxu0
      %302 = vdwg.mxu0
      %v303 = vadd.f32 %v228, %v300
      %304 = vst [vmem:[#allocation5] sm:$0x1] %v303
    $region25: #{tpu_custom_call.1} parent=1 // pred_fallthru
      _
    %p305 = scmp.ne.s32.totalorder 0, 0
    // Predicated region
    $region26: #{tpu_custom_call.1} parent=1 // pred_check
      %p306 = pneg %p305
    $region27: #{tpu_custom_call.1} parent=1 // pred_check_branch
      %308 = sbr.rel (%p306) target = $region29
    $region28: #{tpu_custom_call.1} parent=1 // pred_region
      %v309 = vld [vmem:[#allocation5] sm:$0x1]
      %vm310 = vcmask 64512
      %v312 = vsel %vm310, 1.0, 0
      %314 = vmatprep.subr.mxu0 0.0
      %315 = vmatpush1.msra.mxu0 0.0
      %316 = vmatprep.subr.mxu0 0.0
      %317 = vmatpush1.msra.mxu0 0.0
      %318 = vmatprep.subr.mxu0 0.0
      %319 = vmatpush1.msra.mxu0 0.0
      %320 = vmatprep.subr.mxu0 0.0
      %321 = vmatpush1.msra.mxu0 0.0
      %322 = vmatprep.subr.mxu0 0.0
      %323 = vmatpush1.msra.mxu0 0.0
      %324 = vmatprep.subr.mxu0 0.0
      %325 = vmatpush1.msra.mxu0 0.0
      %326 = vmatprep.subr.mxu0 0.0
      %327 = vmatpush1.msra.mxu0 0.0
      %328 = vmatprep.subr.mxu0 0.0
      %329 = vmatpush1.msra.mxu0 0.0
      %330 = vmatprep.subr.mxu0 0.0
      %331 = vmatpush1.msra.mxu0 0.0
      %332 = vmatprep.subr.mxu0 0.0
      %333 = vmatpush1.msra.mxu0 0.0
      %334 = vmatprep.subr.mxu0 0.0
      %335 = vmatpush1.msra.mxu0 0.0
      %336 = vmatprep.subr.mxu0 0.0
      %337 = vmatpush1.msra.mxu0 0.0
      %338 = vmatprep.subr.mxu0 0.0
      %339 = vmatpush1.msra.mxu0 0.0
      %340 = vmatprep.subr.mxu0 0.0
      %341 = vmatpush1.msra.mxu0 0.0
      %342 = vmatprep.subr.mxu0 0.0
      %343 = vmatpush1.msra.mxu0 0.0
      %344 = vmatprep.subr.mxu0 0.0
      %345 = vmatpush1.msra.mxu0 %v217
      %346 = vmatprep.subr.mxu0 0.0
      %347 = vmatpush2.msra.mxu0 0.0
      %348 = vmatprep.subr.mxu0 0.0
      %349 = vmatpush2.msra.mxu0 0.0
      %350 = vmatprep.subr.mxu0 0.0
      %351 = vmatpush2.msra.mxu0 0.0
      %352 = vmatprep.subr.mxu0 0.0
      %353 = vmatpush2.msra.mxu0 0.0
      %354 = vmatprep.subr.mxu0 0.0
      %355 = vmatpush2.msra.mxu0 0.0
      %356 = vmatprep.subr.mxu0 0.0
      %357 = vmatpush2.msra.mxu0 0.0
      %358 = vmatprep.subr.mxu0 0.0
      %359 = vmatpush2.msra.mxu0 0.0
      %360 = vmatprep.subr.mxu0 0.0
      %361 = vmatpush2.msra.mxu0 0.0
      %362 = vmatprep.subr.mxu0 0.0
      %363 = vmatpush2.msra.mxu0 0.0
      %364 = vmatprep.subr.mxu0 0.0
      %365 = vmatpush2.msra.mxu0 0.0
      %366 = vmatprep.subr.mxu0 0.0
      %367 = vmatpush2.msra.mxu0 0.0
      %368 = vmatprep.subr.mxu0 0.0
      %369 = vmatpush2.msra.mxu0 0.0
      %370 = vmatprep.subr.mxu0 0.0
      %371 = vmatpush2.msra.mxu0 0.0
      %372 = vmatprep.subr.mxu0 0.0
      %373 = vmatpush2.msra.mxu0 0.0
      %374 = vmatprep.subr.mxu0 0.0
      %375 = vmatpush2.msra.mxu0 0.0
      %376 = vmatprep.subr.mxu0 0.0
      %377 = vmatpush2.msra.mxu0 0.0
      %378 = vmatprep.mubr.f32.mxu0 0.0
      %379 = vmatmul.mubr.f32.gmra.mxu0 %v312
      %v380 = vpop.f32.mrf.mxu0
      %v381 = vadd.f32 0.0, %v380
      %v382 = vpop.f32.mrf.mxu0
      %383 = vdwg.mxu0
      %v384 = vadd.f32 %v309, %v381
      %385 = vst [vmem:[#allocation5] sm:$0x1] %v384
    $region29: #{tpu_custom_call.1} parent=1 // pred_fallthru
      _
    // Predicated region
    $region30: #{tpu_custom_call.1} parent=1 // pred_check
      %p386 = pneg %p18
    $region31: #{tpu_custom_call.1} parent=1 // pred_check_branch
      %388 = sbr.rel (%p386) target = $region33
    $region32: #{tpu_custom_call.1} parent=1 // pred_region
      %v389 = vld [vmem:[#allocation5] sm:$0x1]
      %vm390 = vcmask 1040384
      %v391 = vsel %vm390, %v389, 0.0
      %392 = vadd.xlane.f32.xlu0 %v391
      %v393 = vpop.xlane.xlu0 %392
      %v394 = vrot.slane %v393, 4
      %v395 = vadd.f32 %v393, %v394
      %v396 = vrot.slane %v395, 2
      %v397 = vadd.f32 %v395, %v396
      %v398 = vrot.slane %v397, 1
      %v399 = vadd.f32 %v397, %v398
      %s400 = vtos %v399
      %s401 = scalar_lea.smem [#allocation6], 0
      %402 = sst [smem:[%s401]] %s400
    $region33: #{tpu_custom_call.1} parent=1 // pred_fallthru
      _
    // Predicated region
    $region34: #{tpu_custom_call.1} parent=1 // pred_check
      _
    $region35: #{tpu_custom_call.1} parent=1 // pred_check_branch
      %404 = sbr.rel (0) target = $region37
    $region36: #{tpu_custom_call.1} parent=1 // pred_region
      %s406 = ssub.s32 16, 16
      %407 = vsyncadd [#allocation7], %s406
      %410 = dma.smem_to_hbm [#allocation6], 16, %s4, [#allocation7]
    $region37: #{tpu_custom_call.1} parent=1 // pred_fallthru
      _
    // Predicated region
    $region38: #{tpu_custom_call.1} parent=1 // pred_check
      _
    $region39: #{tpu_custom_call.1} parent=1 // pred_check_branch
      %412 = sbr.rel (0) target = $region41
    $region40: #{tpu_custom_call.1} parent=1 // pred_region
      %413 = dma.done [#allocation7], 16
    $region41: #{tpu_custom_call.1} parent=1 // pred_fallthru
      _
    %414 = sfence
    %415 = vsyncpa [#allocation7], 1

</llo_original>
